<compile_context>
chip_gen: v5e
topology: v5e:2x2
jax: 0.10.0
libtpu: 0.0.40
codegen_flags: <defaults>
</compile_context>

<pallas_src>
import jax
import jax.numpy as jnp
from jax.experimental import pallas as pl
from jax.experimental.pallas import tpu as pltpu

IN_F, H1_F, H2_F, OUT_F = 8, 6, 4, 1
S = 16                      # samples packed per lane-row (S * IN_F == 128 lanes)
LANES = S * IN_F            # 128

# Packed-parameter layout: one (312, 96) f32 buffer (single DMA, VMEM-resident).
#   rows   0:128, cols 0:96 -> W1_big = blockdiag_16(W1^T)   (128, 96)
#   rows 128:224, cols 0:64 -> W2_big = blockdiag_16(W2^T)   ( 96, 64)
#   rows 224:288, cols 0:16 -> W3_big = blockdiag_16(W3^T)   ( 64, 16)
#   row  288    , cols 0:96 -> b1 tiled 16x
#   row  296    , cols 0:64 -> b2 tiled 16x
#   row  304    , cols 0:16 -> b3 tiled 16x
P_ROWS, P_COLS = 312, 96


def _sigmoid(x):
    # EUP-only logistic: 0.5*tanh(0.5*x)+0.5  (mathematically == 1/(1+exp(-x))).
    return 0.5 * jnp.tanh(0.5 * x) + 0.5


def mlp_kernel(p_ref, x_ref, o_ref):
    # p_ref: (312, 96)  packed block-diagonal weights + tiled biases (resident)
    # x_ref: (rb, 128)  each row holds 16 consecutive samples x 8 features
    # o_ref: (rb, 16)   each row holds the 16 corresponding predictions
    x = x_ref[...].astype(jnp.bfloat16)

    w1 = p_ref[0:128, :].astype(jnp.bfloat16)          # (128, 96)
    w2 = p_ref[128:224, 0:64].astype(jnp.bfloat16)     # ( 96, 64)
    w3 = p_ref[224:288, 0:16].astype(jnp.bfloat16)     # ( 64, 16)
    b1 = p_ref[288:289, :]                              # (1, 96) f32
    b2 = p_ref[296:297, 0:64]                           # (1, 64) f32
    b3 = p_ref[304:305, 0:16]                           # (1, 16) f32

    h1 = _sigmoid(jnp.dot(x, w1, preferred_element_type=jnp.float32) + b1)   # (rb, 96)
    h2 = _sigmoid(jnp.dot(h1.astype(jnp.bfloat16), w2,
                          preferred_element_type=jnp.float32) + b2)          # (rb, 64)
    y = _sigmoid(jnp.dot(h2.astype(jnp.bfloat16), w3,
                         preferred_element_type=jnp.float32) + b3)           # (rb, 16)
    o_ref[...] = y.astype(o_ref.dtype)


def pack_params(params):
    """Expand PyTorch-shaped (W1,b1,W2,b2,W3,b3) into the packed block-diagonal buffer."""
    w1, b1, w2, b2, w3, b3 = (jnp.asarray(p, jnp.float32) for p in params)
    eye = jnp.eye(S, dtype=jnp.float32)
    w1b = jnp.kron(eye, w1.T)     # (128, 96)
    w2b = jnp.kron(eye, w2.T)     # ( 96, 64)
    w3b = jnp.kron(eye, w3.T)     # ( 64, 16)
    p = jnp.zeros((P_ROWS, P_COLS), jnp.float32)
    p = p.at[0:128, 0:96].set(w1b)
    p = p.at[128:224, 0:64].set(w2b)
    p = p.at[224:288, 0:16].set(w3b)
    p = p.at[288, 0:96].set(jnp.tile(b1, S))
    p = p.at[296, 0:64].set(jnp.tile(b2, S))
    p = p.at[304, 0:16].set(jnp.tile(b3, S))
    return p


def mlp_forward(x, packed_params, *, max_block_rows=2048):
    """x: (B, 8) row-major (PyTorch nn.Linear convention). Returns (B, 1)."""
    B, fin = x.shape
    assert fin == IN_F
    x = x.astype(jnp.float32)

    # Tiny row pad only when B is not a multiple of 16 (skipped entirely otherwise).
    Bp = ((B + S - 1) // S) * S
    if Bp != B:
        x = jnp.pad(x, ((0, Bp - B), (0, 0)))

    # Memory-order-preserving reshape: 16 samples per 128-lane row (no data movement).
    nrows = Bp // S
    x2 = x.reshape(nrows, LANES)

    if nrows <= 8:
        rb = nrows                                   # single full block (demo-sized B)
    else:
        # >=2 row-tiles (v7x megacore gets work on both TCs), capped at 32768 samples/tile.
        rb = min(max_block_rows, ((nrows + 1) // 2 + 7) // 8 * 8)
    grid = (pl.cdiv(nrows, rb),)

    y2 = pl.pallas_call(
        mlp_kernel,
        out_shape=jax.ShapeDtypeStruct((nrows, S), jnp.float32),
        grid_spec=pl.GridSpec(
            grid=grid,
            in_specs=[
                pl.BlockSpec((P_ROWS, P_COLS), lambda i: (0, 0)),  # params resident
                pl.BlockSpec((rb, LANES), lambda i: (i, 0)),       # batch row-tile
            ],
            out_specs=pl.BlockSpec((rb, S), lambda i: (i, 0)),
        ),
        compiler_params=pltpu.CompilerParams(
            dimension_semantics=("parallel",)),
    )(packed_params, x2)

    # (nrows, 16) -> (Bp, 1) is memory-order preserving; slice off any row padding.
    return y2.reshape(Bp, 1)[:B]


def init_params(key):
    # Deterministic PyTorch-shaped parameters (nn.Linear default init bounds).
    ks = jax.random.split(key, 6)

    def uniform(k, shape, fan_in):
        bound = 1.0 / jnp.sqrt(fan_in)
        return jax.random.uniform(k, shape, jnp.float32, -bound, bound)

    w1 = uniform(ks[0], (H1_F, IN_F), float(IN_F))
    b1 = uniform(ks[1], (H1_F,), float(IN_F))
    w2 = uniform(ks[2], (H2_F, H1_F), float(H1_F))
    b2 = uniform(ks[3], (H2_F,), float(H1_F))
    w3 = uniform(ks[4], (OUT_F, H2_F), float(H2_F))
    b3 = uniform(ks[5], (OUT_F,), float(H2_F))
    return (w1, b1, w2, b2, w3, b3)


def reference_forward(x, params):
    w1, b1, w2, b2, w3, b3 = params
    h1 = jax.nn.sigmoid(x @ w1.T + b1)
    h2 = jax.nn.sigmoid(h1 @ w2.T + b2)
    return jax.nn.sigmoid(h2 @ w3.T + b3)


if __name__ == "__main__":
    key = jax.random.PRNGKey(0)
    kx, kp = jax.random.split(key)

    params = init_params(kp)
    packed = pack_params(params)
    fwd = jax.jit(mlp_forward)

    # Multiple-of-16 batch: exercises the no-pad fast path.
    B = 32
    x = jax.random.normal(kx, (B, IN_F), jnp.float32)
    y = jax.block_until_ready(fwd(x, packed))
    y_ref = reference_forward(x, params)
    assert y.shape == (B, 1)
    assert jnp.allclose(y, y_ref, atol=2e-2)  # bf16 MXU operands -> relaxed tolerance

    # Ragged batch: exercises the tiny row-pad + tail-slice path.
    B2 = 19
    xr = jax.random.normal(kx, (B2, IN_F), jnp.float32)
    yr = jax.block_until_ready(fwd(xr, packed))
    yr_ref = reference_forward(xr, params)
    assert yr.shape == (B2, 1)
    assert jnp.allclose(yr, yr_ref, atol=2e-2)

    print("KERNEL_OK")
</pallas_src>

<mosaic_0001>
module attributes {stable_mosaic.version = 11 : i64} {
  func.func @mlp_kernel(%arg0: i32, %arg1: memref<312x96xf32, #tpu.memory_space<vmem>>, %arg2: memref<2x128xf32, #tpu.memory_space<vmem>>, %arg3: memref<2x16xf32, #tpu.memory_space<vmem>>) attributes {dimension_semantics = [#tpu.dimension_semantics<parallel>], iteration_bounds = array<i64: 1>, scalar_prefetch = 0 : i64, scratch_operands = 0 : i64, tpu.core_type = #tpu.core_type<tc>, window_params = [{pipeline_mode = #tpu.pipeline_mode<synchronous>, transform_indices = @transform_0, window_bounds = array<i64: 312, 96>}, {transform_indices = @transform_1, window_bounds = array<i64: 2, 128>}, {transform_indices = @transform_2, window_bounds = array<i64: 2, 16>}]} {
    %c0 = arith.constant 0 : index
    %c0_0 = arith.constant 0 : index
    %0 = vector.load %arg2[%c0, %c0_0] : memref<2x128xf32, #tpu.memory_space<vmem>>, vector<2x128xf32>
    %1 = arith.truncf %0 : vector<2x128xf32> to vector<2x128xbf16>
    %c0_1 = arith.constant 0 : index
    %c0_2 = arith.constant 0 : index
    %2 = vector.load %arg1[%c0_1, %c0_2] : memref<312x96xf32, #tpu.memory_space<vmem>>, vector<128x96xf32>
    %3 = arith.truncf %2 : vector<128x96xf32> to vector<128x96xbf16>
    %c128 = arith.constant 128 : index
    %c0_3 = arith.constant 0 : index
    %4 = vector.load %arg1[%c128, %c0_3] : memref<312x96xf32, #tpu.memory_space<vmem>>, vector<96x64xf32>
    %5 = arith.truncf %4 : vector<96x64xf32> to vector<96x64xbf16>
    %c224 = arith.constant 224 : index
    %c0_4 = arith.constant 0 : index
    %6 = vector.load %arg1[%c224, %c0_4] : memref<312x96xf32, #tpu.memory_space<vmem>>, vector<64x16xf32>
    %7 = arith.truncf %6 : vector<64x16xf32> to vector<64x16xbf16>
    %c288 = arith.constant 288 : index
    %c0_5 = arith.constant 0 : index
    %8 = vector.load %arg1[%c288, %c0_5] : memref<312x96xf32, #tpu.memory_space<vmem>>, vector<1x96xf32>
    %c296 = arith.constant 296 : index
    %c0_6 = arith.constant 0 : index
    %9 = vector.load %arg1[%c296, %c0_6] : memref<312x96xf32, #tpu.memory_space<vmem>>, vector<1x64xf32>
    %c304 = arith.constant 304 : index
    %c0_7 = arith.constant 0 : index
    %10 = vector.load %arg1[%c304, %c0_7] : memref<312x96xf32, #tpu.memory_space<vmem>>, vector<1x16xf32>
    %cst = arith.constant dense<0.000000e+00> : vector<2x96xf32>
    %11 = tpu.matmul %1, %3, %cst {dimension_numbers = #tpu.dot_dimension_numbers<[1], [0], [0], [1], [0, 0, 1, 1], [], []>} : vector<2x128xbf16>, vector<128x96xbf16>, vector<2x96xf32> -> vector<2x96xf32>
    %12 = vector.broadcast %8 : vector<1x96xf32> to vector<2x96xf32>
    %13 = arith.addf %11, %12 : vector<2x96xf32>
    %cst_8 = arith.constant 5.000000e-01 : f32
    %14 = vector.broadcast %cst_8 : f32 to vector<2x96xf32>
    %15 = arith.mulf %14, %13 : vector<2x96xf32>
    %16 = math.tanh %15 : vector<2x96xf32>
    %cst_9 = arith.constant 5.000000e-01 : f32
    %17 = vector.broadcast %cst_9 : f32 to vector<2x96xf32>
    %18 = arith.mulf %17, %16 : vector<2x96xf32>
    %cst_10 = arith.constant 5.000000e-01 : f32
    %19 = vector.broadcast %cst_10 : f32 to vector<2x96xf32>
    %20 = arith.addf %18, %19 : vector<2x96xf32>
    %21 = arith.truncf %20 : vector<2x96xf32> to vector<2x96xbf16>
    %cst_11 = arith.constant dense<0.000000e+00> : vector<2x64xf32>
    %22 = tpu.matmul %21, %5, %cst_11 {dimension_numbers = #tpu.dot_dimension_numbers<[1], [0], [0], [1], [0, 0, 1, 1], [], []>} : vector<2x96xbf16>, vector<96x64xbf16>, vector<2x64xf32> -> vector<2x64xf32>
    %23 = vector.broadcast %9 : vector<1x64xf32> to vector<2x64xf32>
    %24 = arith.addf %22, %23 : vector<2x64xf32>
    %cst_12 = arith.constant 5.000000e-01 : f32
    %25 = vector.broadcast %cst_12 : f32 to vector<2x64xf32>
    %26 = arith.mulf %25, %24 : vector<2x64xf32>
    %27 = math.tanh %26 : vector<2x64xf32>
    %cst_13 = arith.constant 5.000000e-01 : f32
    %28 = vector.broadcast %cst_13 : f32 to vector<2x64xf32>
    %29 = arith.mulf %28, %27 : vector<2x64xf32>
    %cst_14 = arith.constant 5.000000e-01 : f32
    %30 = vector.broadcast %cst_14 : f32 to vector<2x64xf32>
    %31 = arith.addf %29, %30 : vector<2x64xf32>
    %32 = arith.truncf %31 : vector<2x64xf32> to vector<2x64xbf16>
    %cst_15 = arith.constant dense<0.000000e+00> : vector<2x16xf32>
    %33 = tpu.matmul %32, %7, %cst_15 {dimension_numbers = #tpu.dot_dimension_numbers<[1], [0], [0], [1], [0, 0, 1, 1], [], []>} : vector<2x64xbf16>, vector<64x16xbf16>, vector<2x16xf32> -> vector<2x16xf32>
    %34 = vector.broadcast %10 : vector<1x16xf32> to vector<2x16xf32>
    %35 = arith.addf %33, %34 : vector<2x16xf32>
    %cst_16 = arith.constant 5.000000e-01 : f32
    %36 = vector.broadcast %cst_16 : f32 to vector<2x16xf32>
    %37 = arith.mulf %36, %35 : vector<2x16xf32>
    %38 = math.tanh %37 : vector<2x16xf32>
    %cst_17 = arith.constant 5.000000e-01 : f32
    %39 = vector.broadcast %cst_17 : f32 to vector<2x16xf32>
    %40 = arith.mulf %39, %38 : vector<2x16xf32>
    %cst_18 = arith.constant 5.000000e-01 : f32
    %41 = vector.broadcast %cst_18 : f32 to vector<2x16xf32>
    %42 = arith.addf %40, %41 : vector<2x16xf32>
    %c0_19 = arith.constant 0 : index
    %c0_20 = arith.constant 0 : index
    %43 = vector.load %arg3[%c0_19, %c0_20] : memref<2x16xf32, #tpu.memory_space<vmem>>, vector<2x16xf32>
    tpu.vector_store %arg3[%c0_19, %c0_20], %42 {strides = array<i32>} : memref<2x16xf32, #tpu.memory_space<vmem>>, vector<2x16xf32>,
    return
  }
  func.func @transform_0(%arg0: i32) -> (i32, i32) {
    %c0_i32 = arith.constant 0 : i32
    %c0_i32_0 = arith.constant 0 : i32
    %c0_i32_1 = arith.constant 0 : i32
    return %c0_i32, %c0_i32_0 : i32, i32
  }
  func.func @transform_1(%arg0: i32) -> (i32, i32) {
    %c0_i32 = arith.constant 0 : i32
    %c0_i32_0 = arith.constant 0 : i32
    return %arg0, %c0_i32 : i32, i32
  }
  func.func @transform_2(%arg0: i32) -> (i32, i32) {
    %c0_i32 = arith.constant 0 : i32
    %c0_i32_0 = arith.constant 0 : i32
    return %arg0, %c0_i32 : i32, i32
  }
}

</mosaic_0001>

<llo_original>
// kernel: mlp_forward.1
$region0: #{mlp_forward.1}
  #allocation0 [shape = 'u32[]', space=smem, size = 0x4, offset = 0x4, fixed_abs, tag = 'smem constant byte address 0x4 - core index']
  #allocation1 [shape = 'u32[72,128]{1,0:T(1,128)}', space=vmem, size = 0x9000, scoped, tag = 'internal scratch']
  %s0 = inlined_call_operand.vmem [shape: f32[312,96], index: 0, kind: input, shape index: {}]
  %s1 = inlined_call_operand.vmem [shape: f32[2,128], index: 1, kind: input, shape index: {}]
  %s2 = inlined_call_operand.vmem [shape: f32[2,16], index: 2, kind: output, shape index: {}]
  %s3 = sld [smem:[#allocation0]]
  $region18: #{mlp_forward.1} parent=0
    _
  %s5 = ssub.s32 1, %s3
  %s6 = scalar_select 0, %s5, %s3
  // Predicated region
  $region2: #{mlp_forward.1} parent=0 // pred_check
    _
  $region3: #{mlp_forward.1} parent=0 // pred_check_branch
    %8 = sbr.rel (0) target = $region5
  $region4: #{mlp_forward.1} parent=0 // pred_region
    _
  $region5: #{mlp_forward.1} parent=0 // pred_fallthru
    _
  // Predicated region
  $region6: #{mlp_forward.1} parent=0 // pred_check
    _
  $region7: #{mlp_forward.1} parent=0 // pred_check_branch
    %10 = sbr.rel (0) target = $region9
  $region8: #{mlp_forward.1} parent=0 // pred_region
    _
  $region9: #{mlp_forward.1} parent=0 // pred_fallthru
    _
  %v12 = vld [vmem:[%s1] sm:$0x3]
  %v13 = vpack.c.bf16 %v12, %v12
  %v14 = vld [vmem:[%s0] sm:$0xff]
  %v15 = vld [vmem:[%s0 + $0x8] sm:$0xff]
  %v16 = vld [vmem:[%s0 + $0x10] sm:$0xff]
  %v17 = vld [vmem:[%s0 + $0x18] sm:$0xff]
  %v18 = vld [vmem:[%s0 + $0x20] sm:$0xff]
  %v19 = vld [vmem:[%s0 + $0x28] sm:$0xff]
  %v20 = vld [vmem:[%s0 + $0x30] sm:$0xff]
  %v21 = vld [vmem:[%s0 + $0x38] sm:$0xff]
  %v22 = vld [vmem:[%s0 + $0x40] sm:$0xff]
  %v23 = vld [vmem:[%s0 + $0x48] sm:$0xff]
  %v24 = vld [vmem:[%s0 + $0x50] sm:$0xff]
  %v25 = vld [vmem:[%s0 + $0x58] sm:$0xff]
  %v26 = vld [vmem:[%s0 + $0x60] sm:$0xff]
  %v27 = vld [vmem:[%s0 + $0x68] sm:$0xff]
  %v28 = vld [vmem:[%s0 + $0x70] sm:$0xff]
  %v29 = vld [vmem:[%s0 + $0x78] sm:$0xff]
  %v30 = vpack.c.bf16 %v15, %v14
  %v31 = vpack.c.bf16 %v17, %v16
  %v32 = vpack.c.bf16 %v19, %v18
  %v33 = vpack.c.bf16 %v21, %v20
  %v34 = vpack.c.bf16 %v23, %v22
  %v35 = vpack.c.bf16 %v25, %v24
  %v36 = vpack.c.bf16 %v27, %v26
  %v37 = vpack.c.bf16 %v29, %v28
  %v38 = vld [vmem:[%s0 + $0x80] sm:$0xff]
  %v39 = vld [vmem:[%s0 + $0x88] sm:$0xff]
  %v40 = vld [vmem:[%s0 + $0x90] sm:$0xff]
  %v41 = vld [vmem:[%s0 + $0x98] sm:$0xff]
  %v42 = vld [vmem:[%s0 + $0xa0] sm:$0xff]
  %v43 = vld [vmem:[%s0 + $0xa8] sm:$0xff]
  %v44 = vld [vmem:[%s0 + $0xb0] sm:$0xff]
  %v45 = vld [vmem:[%s0 + $0xb8] sm:$0xff]
  %v46 = vld [vmem:[%s0 + $0xc0] sm:$0xff]
  %v47 = vld [vmem:[%s0 + $0xc8] sm:$0xff]
  %v48 = vld [vmem:[%s0 + $0xd0] sm:$0xff]
  %v49 = vld [vmem:[%s0 + $0xd8] sm:$0xff]
  %v50 = vpack.c.bf16 %v39, %v38
  %v51 = vpack.c.bf16 %v41, %v40
  %v52 = vpack.c.bf16 %v43, %v42
  %v53 = vpack.c.bf16 %v45, %v44
  %v54 = vpack.c.bf16 %v47, %v46
  %v55 = vpack.c.bf16 %v49, %v48
  %v56 = vld [vmem:[%s0 + $0xe0] sm:$0xff]
  %v57 = vld [vmem:[%s0 + $0xe8] sm:$0xff]
  %v58 = vld [vmem:[%s0 + $0xf0] sm:$0xff]
  %v59 = vld [vmem:[%s0 + $0xf8] sm:$0xff]
  %v60 = vld [vmem:[%s0 + $0x100] sm:$0xff]
  %v61 = vld [vmem:[%s0 + $0x108] sm:$0xff]
  %v62 = vld [vmem:[%s0 + $0x110] sm:$0xff]
  %v63 = vld [vmem:[%s0 + $0x118] sm:$0xff]
  %v64 = vpack.c.bf16 %v57, %v56
  %v65 = vpack.c.bf16 %v59, %v58
  %v66 = vpack.c.bf16 %v61, %v60
  %v67 = vpack.c.bf16 %v63, %v62
  %v68 = vld [vmem:[%s0 + $0x120] sm:$0x1]
  %v69 = vld [vmem:[%s0 + $0x128] sm:$0x1]
  %v70 = vld [vmem:[%s0 + $0x130] sm:$0x1]
  %v71 = vperm.slane %v68, 0
  %72 = vmatpush.bf16.msra.mxu0 %v37
  %73 = vmatpush.bf16.msra.mxu0 %v36
  %74 = vmatpush.bf16.msra.mxu0 %v35
  %75 = vmatpush.bf16.msra.mxu0 %v34
  %76 = vmatpush.bf16.msra.mxu0 %v33
  %77 = vmatpush.bf16.msra.mxu0 %v32
  %78 = vmatpush.bf16.msra.mxu0 %v31
  %79 = vmatpush.bf16.msra.mxu0 %v30
  %80 = vmatmul.bf16.gmra.mxu0 %v13
  %v81 = vpop.f32.mrf.mxu0
  %v82 = vadd.f32 %v71, %v81
  %v83 = vpop.f32.mrf.mxu0
  %84 = vdwg.mxu0
  %v85 = vmul.f32 %v82, 0.5
  %v86 = vtanh.pop %v85
  %v87 = vmul.f32 %v86, 0.5
  %v88 = vadd.f32 %v87, 0.5
  %v89 = vpack.c.bf16 %v88, %v88
  %v90 = vperm.slane %v69, 0
  %vm91 = vcmask 785408
  %v93 = vsel %vm91, %v89, 0
  %95 = vmatpush.bf16.msra.mxu0 0
  %96 = vmatpush.bf16.msra.mxu0 0
  %97 = vmatpush.bf16.msra.mxu0 %v55
  %98 = vmatpush.bf16.msra.mxu0 %v54
  %99 = vmatpush.bf16.msra.mxu0 %v53
  %100 = vmatpush.bf16.msra.mxu0 %v52
  %101 = vmatpush.bf16.msra.mxu0 %v51
  %102 = vmatpush.bf16.msra.mxu0 %v50
  %103 = vmatmul.bf16.gmra.mxu0 %v93
  %v104 = vpop.f32.mrf.mxu0
  %v105 = vadd.f32 %v90, %v104
  %v106 = vpop.f32.mrf.mxu0
  %107 = vdwg.mxu0
  %v108 = vmul.f32 %v105, 0.5
  %v109 = vtanh.pop %v108
  %v110 = vmul.f32 %v109, 0.5
  %v111 = vadd.f32 %v110, 0.5
  %v112 = vpack.c.bf16 %v111, %v111
  %v113 = vperm.slane %v70, 0
  %vm114 = vcmask 523264
  %v116 = vsel %vm114, %v112, 0
  %118 = vmatpush.bf16.msra.mxu0 0
  %119 = vmatpush.bf16.msra.mxu0 0
  %120 = vmatpush.bf16.msra.mxu0 0
  %121 = vmatpush.bf16.msra.mxu0 0
  %122 = vmatpush.bf16.msra.mxu0 %v67
  %123 = vmatpush.bf16.msra.mxu0 %v66
  %124 = vmatpush.bf16.msra.mxu0 %v65
  %125 = vmatpush.bf16.msra.mxu0 %v64
  %126 = vmatmul.bf16.gmra.mxu0 %v116
  %v127 = vpop.f32.mrf.mxu0
  %v128 = vadd.f32 %v113, %v127
  %v129 = vpop.f32.mrf.mxu0
  %130 = vdwg.mxu0
  %v131 = vmul.f32 %v128, 0.5
  %v132 = vtanh.pop %v131
  %v133 = vmul.f32 %v132, 0.5
  %v134 = vadd.f32 %v133, 0.5
  %vm135 = vcmask 123904
  %136 = vst.msk [vmem:[%s2] sm:$0x3] %vm135, %v134
  // Predicated region
  $region10: #{mlp_forward.1} parent=0 // pred_check
    _
  $region11: #{mlp_forward.1} parent=0 // pred_check_branch
    %138 = sbr.rel (0) target = $region13
  $region12: #{mlp_forward.1} parent=0 // pred_region
    _
  $region13: #{mlp_forward.1} parent=0 // pred_fallthru
    _
  // Predicated region
  $region14: #{mlp_forward.1} parent=0 // pred_check
    _
  $region15: #{mlp_forward.1} parent=0 // pred_check_branch
    %140 = sbr.rel (0) target = $region17
  $region16: #{mlp_forward.1} parent=0 // pred_region
    _
  $region17: #{mlp_forward.1} parent=0 // pred_fallthru
    _

</llo_original>
